<compile_context>
chip_gen: v6e
topology: v6e:2x2x1
jax: 0.10.0
libtpu: 0.0.40
codegen_flags: <defaults>
</compile_context>

<pallas_src>
import functools

import jax
import jax.numpy as jnp
from jax.experimental import pallas as pl
from jax.experimental.pallas import tpu as pltpu

_SCALING_FACTOR = 0.3611
_SHIFT_FACTOR = 0.1159

# Budget for the double-buffered (input + output) tile footprint in VMEM.
# Comfortably inside the default scoped limit on every generation once we add
# a small headroom via vmem_limit_bytes below.
_VMEM_TILE_BUDGET_BYTES = 24 * 1024 * 1024


def _scale_shift_kernel(x_ref, o_ref, *, inv_scale, shift):
    # Pure VPU element-wise op on one (row_tile, D) tile:
    #   out = x * (1 / 0.3611) + 0.1159
    x = x_ref[...].astype(jnp.float32)
    o_ref[...] = (x * inv_scale + shift).astype(o_ref.dtype)


def _choose_row_tile(rows, d, itemsize):
    """Largest sublane-aligned row tile whose 2x(in+out) buffers fit the budget."""
    per_row_bytes = 2 * d * (itemsize + itemsize)  # double-buffered in + out
    tr = max(int(_VMEM_TILE_BUDGET_BYTES // max(per_row_bytes, 1)), 1)
    tr = min(tr, rows)
    if rows >= 8:
        tr = max(8, (tr // 8) * 8)  # sublane aligned
    else:
        tr = rows  # full-extent block is always legal
    return tr


def vae_decoder_forward(hidden_states):
    """Pallas implementation of the explicit part of VAE_Decoder.forward.

    hidden_states: (..., D) float array (e.g. (1, 4096, 3072) at real size).
    Returns `hidden_states / 0.3611 + 0.1159` with the same shape/dtype.
    """
    orig_shape = hidden_states.shape
    orig_dtype = hidden_states.dtype
    d = orig_shape[-1]
    rows = 1
    for s in orig_shape[:-1]:
        rows *= s
    x2d = hidden_states.reshape(rows, d)

    itemsize = jnp.dtype(orig_dtype).itemsize
    tr = _choose_row_tile(rows, d, itemsize)

    kernel = functools.partial(
        _scale_shift_kernel,
        inv_scale=float(1.0 / _SCALING_FACTOR),
        shift=float(_SHIFT_FACTOR),
    )

    # VMEM cap: double-buffered in + out tiles plus a little headroom, clamped
    # so we never request more than v7x's 64 MiB physical VMEM.
    tile_bytes = tr * d * itemsize
    vmem_limit = 4 * tile_bytes + (4 << 20)
    vmem_limit = max(16 * 1024 * 1024, min(vmem_limit, 64 * 1024 * 1024))

    out2d = pl.pallas_call(
        kernel,
        out_shape=jax.ShapeDtypeStruct((rows, d), orig_dtype),
        grid_spec=pltpu.PrefetchScalarGridSpec(
            num_scalar_prefetch=0,
            grid=(pl.cdiv(rows, tr),),
            in_specs=[pl.BlockSpec((tr, d), lambda i: (i, 0))],
            out_specs=pl.BlockSpec((tr, d), lambda i: (i, 0)),
        ),
        compiler_params=pltpu.CompilerParams(
            dimension_semantics=("parallel",),
            vmem_limit_bytes=int(vmem_limit),
        ),
    )(x2d)

    return out2d.reshape(orig_shape)


if __name__ == "__main__":
    # Small version of the real (1, 4096, 3072) latent tensor.
    B, S, D = 1, 128, 384

    key = jax.random.PRNGKey(0)
    hidden_states = jax.random.normal(key, (B, S, D), dtype=jnp.float32)

    out = vae_decoder_forward(hidden_states)
    out = jax.block_until_ready(out)

    # Pure-JAX reference for the explicit forward arithmetic.
    ref = hidden_states / _SCALING_FACTOR + _SHIFT_FACTOR
    assert out.shape == (B, S, D)
    assert out.dtype == hidden_states.dtype
    assert jnp.allclose(out, ref, atol=1e-5, rtol=1e-5)

    # TODO(synk): chain the Pallas port of vae.decode(...) here once the VAE
    # architecture/weights are specified; `out` is exactly its input.

    print("KERNEL_OK")
</pallas_src>

<mosaic_0001>
module attributes {stable_mosaic.version = 11 : i64} {
  func.func @_scale_shift_kernel(%arg0: i32, %arg1: memref<128x384xf32, #tpu.memory_space<vmem>>, %arg2: memref<128x384xf32, #tpu.memory_space<vmem>>) attributes {dimension_semantics = [#tpu.dimension_semantics<parallel>], iteration_bounds = array<i64: 1>, scalar_prefetch = 0 : i64, scratch_operands = 0 : i64, tpu.core_type = #tpu.core_type<tc>, window_params = [{transform_indices = @transform_0, window_bounds = array<i64: 128, 384>}, {transform_indices = @transform_1, window_bounds = array<i64: 128, 384>}]} {
    %c0 = arith.constant 0 : index
    %c0_0 = arith.constant 0 : index
    %0 = vector.load %arg1[%c0, %c0_0] : memref<128x384xf32, #tpu.memory_space<vmem>>, vector<128x384xf32>
    %cst = arith.constant 2.76931596 : f32
    %1 = vector.broadcast %cst : f32 to vector<128x384xf32>
    %2 = arith.mulf %0, %1 : vector<128x384xf32>
    %cst_1 = arith.constant 1.159000e-01 : f32
    %3 = vector.broadcast %cst_1 : f32 to vector<128x384xf32>
    %4 = arith.addf %2, %3 : vector<128x384xf32>
    %c0_2 = arith.constant 0 : index
    %c0_3 = arith.constant 0 : index
    %5 = vector.load %arg2[%c0_2, %c0_3] : memref<128x384xf32, #tpu.memory_space<vmem>>, vector<128x384xf32>
    tpu.vector_store %arg2[%c0_2, %c0_3], %4 {strides = array<i32>} : memref<128x384xf32, #tpu.memory_space<vmem>>, vector<128x384xf32>,
    return
  }
  func.func @transform_0(%arg0: i32) -> (i32, i32) {
    %c0_i32 = arith.constant 0 : i32
    %c0_i32_0 = arith.constant 0 : i32
    return %arg0, %c0_i32 : i32, i32
  }
  func.func @transform_1(%arg0: i32) -> (i32, i32) {
    %c0_i32 = arith.constant 0 : i32
    %c0_i32_0 = arith.constant 0 : i32
    return %arg0, %c0_i32 : i32, i32
  }
}

</mosaic_0001>

<llo_original>
// kernel: tpu_custom_call.1
$region0: #{tpu_custom_call.1}
  #allocation0 [shape = 'u32[]', space=smem, size = 0x4, offset = 0x4, fixed_abs, tag = 'smem constant byte address 0x4 - core index']
  #allocation1 [shape = 'u32[144,128]{1,0:T(1,128)}', space=vmem, size = 0x12000, scoped, tag = 'internal scratch']
  %s0 = inlined_call_operand.hbm [shape: f32[128,384], index: 0, kind: input, shape index: {}]
  %s1 = inlined_call_operand.hbm [shape: f32[128,384], index: 1, kind: output, shape index: {}]
  %s2 = sld [smem:[#allocation0]]
  $region18: #{tpu_custom_call.1} parent=0
    _
  %s4 = ssub.s32 1, %s2
  %s5 = scalar_select 0, %s4, %s2
  $region1: #{tpu_custom_call.1} parent=0
    #allocation2 [shape = 'u8[196608]{0}', space=vmem, size = 0x30000, scoped, tag = 'input window, operand 0, single buffered']
    #allocation3 [shape = 's32[1]{0}', space=sflag, size = 0x4, scoped, tag = 'scoped memory for tpu_custom_call.1']
    #allocation4 [shape = 's32[1]{0}', space=sflag, size = 0x4, scoped, tag = 'scoped memory for tpu_custom_call.1']
    #allocation5 [shape = 'u8[196608]{0}', space=vmem, size = 0x30000, scoped, tag = 'output window, operand 0, single buffered']
    %6 = vsyncpa [#allocation3], 0
    %7 = vsyncpa [#allocation4], 0
    // Predicated region
    $region2: #{tpu_custom_call.1} parent=1 // pred_check
      _
    $region3: #{tpu_custom_call.1} parent=1 // pred_check_branch
      %9 = sbr.rel (0) target = $region5
    $region4: #{tpu_custom_call.1} parent=1 // pred_region
      %s11 = ssub.s32 6144, 6144
      %12 = vsyncadd [#allocation3], %s11
      %s13 = sshll.u32 [#allocation2], 4
      %s14 = int_to_ptr.vmem [resolvable:$true] %s13
      %19 = dma.hbm_to_vmem [thread:$0]  %s0, 6144, %s14, [#allocation3], 384, 384, 24
    $region5: #{tpu_custom_call.1} parent=1 // pred_fallthru
      _
    // Predicated region
    $region6: #{tpu_custom_call.1} parent=1 // pred_check
      _
    $region7: #{tpu_custom_call.1} parent=1 // pred_check_branch
      %21 = sbr.rel (0) target = $region9
    $region8: #{tpu_custom_call.1} parent=1 // pred_region
      %22 = dma.done [#allocation3], 6144
    $region9: #{tpu_custom_call.1} parent=1 // pred_fallthru
      _
    %v23 = vld [vmem:[#allocation2] sm:$0xff]
    %v24 = vld [vmem:[#allocation2 + $0x8] sm:$0xff]
    %v25 = vld [vmem:[#allocation2 + $0x10] sm:$0xff]
    %v26 = vld [vmem:[#allocation2 + $0x18] sm:$0xff]
    %v27 = vld [vmem:[#allocation2 + $0x20] sm:$0xff]
    %v28 = vld [vmem:[#allocation2 + $0x28] sm:$0xff]
    %v29 = vld [vmem:[#allocation2 + $0x30] sm:$0xff]
    %v30 = vld [vmem:[#allocation2 + $0x38] sm:$0xff]
    %v31 = vld [vmem:[#allocation2 + $0x40] sm:$0xff]
    %v32 = vld [vmem:[#allocation2 + $0x48] sm:$0xff]
    %v33 = vld [vmem:[#allocation2 + $0x50] sm:$0xff]
    %v34 = vld [vmem:[#allocation2 + $0x58] sm:$0xff]
    %v35 = vld [vmem:[#allocation2 + $0x60] sm:$0xff]
    %v36 = vld [vmem:[#allocation2 + $0x68] sm:$0xff]
    %v37 = vld [vmem:[#allocation2 + $0x70] sm:$0xff]
    %v38 = vld [vmem:[#allocation2 + $0x78] sm:$0xff]
    %v39 = vld [vmem:[#allocation2 + $0x80] sm:$0xff]
    %v40 = vld [vmem:[#allocation2 + $0x88] sm:$0xff]
    %v41 = vld [vmem:[#allocation2 + $0x90] sm:$0xff]
    %v42 = vld [vmem:[#allocation2 + $0x98] sm:$0xff]
    %v43 = vld [vmem:[#allocation2 + $0xa0] sm:$0xff]
    %v44 = vld [vmem:[#allocation2 + $0xa8] sm:$0xff]
    %v45 = vld [vmem:[#allocation2 + $0xb0] sm:$0xff]
    %v46 = vld [vmem:[#allocation2 + $0xb8] sm:$0xff]
    %v47 = vld [vmem:[#allocation2 + $0xc0] sm:$0xff]
    %v48 = vld [vmem:[#allocation2 + $0xc8] sm:$0xff]
    %v49 = vld [vmem:[#allocation2 + $0xd0] sm:$0xff]
    %v50 = vld [vmem:[#allocation2 + $0xd8] sm:$0xff]
    %v51 = vld [vmem:[#allocation2 + $0xe0] sm:$0xff]
    %v52 = vld [vmem:[#allocation2 + $0xe8] sm:$0xff]
    %v53 = vld [vmem:[#allocation2 + $0xf0] sm:$0xff]
    %v54 = vld [vmem:[#allocation2 + $0xf8] sm:$0xff]
    %v55 = vld [vmem:[#allocation2 + $0x100] sm:$0xff]
    %v56 = vld [vmem:[#allocation2 + $0x108] sm:$0xff]
    %v57 = vld [vmem:[#allocation2 + $0x110] sm:$0xff]
    %v58 = vld [vmem:[#allocation2 + $0x118] sm:$0xff]
    %v59 = vld [vmem:[#allocation2 + $0x120] sm:$0xff]
    %v60 = vld [vmem:[#allocation2 + $0x128] sm:$0xff]
    %v61 = vld [vmem:[#allocation2 + $0x130] sm:$0xff]
    %v62 = vld [vmem:[#allocation2 + $0x138] sm:$0xff]
    %v63 = vld [vmem:[#allocation2 + $0x140] sm:$0xff]
    %v64 = vld [vmem:[#allocation2 + $0x148] sm:$0xff]
    %v65 = vld [vmem:[#allocation2 + $0x150] sm:$0xff]
    %v66 = vld [vmem:[#allocation2 + $0x158] sm:$0xff]
    %v67 = vld [vmem:[#allocation2 + $0x160] sm:$0xff]
    %v68 = vld [vmem:[#allocation2 + $0x168] sm:$0xff]
    %v69 = vld [vmem:[#allocation2 + $0x170] sm:$0xff]
    %v70 = vld [vmem:[#allocation2 + $0x178] sm:$0xff]
    %v71 = vmul.f32 %v23, 2.769316
    %v72 = vmul.f32 %v24, 2.769316
    %v73 = vmul.f32 %v25, 2.769316
    %v74 = vmul.f32 %v26, 2.769316
    %v75 = vmul.f32 %v27, 2.769316
    %v76 = vmul.f32 %v28, 2.769316
    %v77 = vmul.f32 %v29, 2.769316
    %v78 = vmul.f32 %v30, 2.769316
    %v79 = vmul.f32 %v31, 2.769316
    %v80 = vmul.f32 %v32, 2.769316
    %v81 = vmul.f32 %v33, 2.769316
    %v82 = vmul.f32 %v34, 2.769316
    %v83 = vmul.f32 %v35, 2.769316
    %v84 = vmul.f32 %v36, 2.769316
    %v85 = vmul.f32 %v37, 2.769316
    %v86 = vmul.f32 %v38, 2.769316
    %v87 = vmul.f32 %v39, 2.769316
    %v88 = vmul.f32 %v40, 2.769316
    %v89 = vmul.f32 %v41, 2.769316
    %v90 = vmul.f32 %v42, 2.769316
    %v91 = vmul.f32 %v43, 2.769316
    %v92 = vmul.f32 %v44, 2.769316
    %v93 = vmul.f32 %v45, 2.769316
    %v94 = vmul.f32 %v46, 2.769316
    %v95 = vmul.f32 %v47, 2.769316
    %v96 = vmul.f32 %v48, 2.769316
    %v97 = vmul.f32 %v49, 2.769316
    %v98 = vmul.f32 %v50, 2.769316
    %v99 = vmul.f32 %v51, 2.769316
    %v100 = vmul.f32 %v52, 2.769316
    %v101 = vmul.f32 %v53, 2.769316
    %v102 = vmul.f32 %v54, 2.769316
    %v103 = vmul.f32 %v55, 2.769316
    %v104 = vmul.f32 %v56, 2.769316
    %v105 = vmul.f32 %v57, 2.769316
    %v106 = vmul.f32 %v58, 2.769316
    %v107 = vmul.f32 %v59, 2.769316
    %v108 = vmul.f32 %v60, 2.769316
    %v109 = vmul.f32 %v61, 2.769316
    %v110 = vmul.f32 %v62, 2.769316
    %v111 = vmul.f32 %v63, 2.769316
    %v112 = vmul.f32 %v64, 2.769316
    %v113 = vmul.f32 %v65, 2.769316
    %v114 = vmul.f32 %v66, 2.769316
    %v115 = vmul.f32 %v67, 2.769316
    %v116 = vmul.f32 %v68, 2.769316
    %v117 = vmul.f32 %v69, 2.769316
    %v118 = vmul.f32 %v70, 2.769316
    %v119 = vadd.f32 %v71, 0.1159
    %v120 = vadd.f32 %v72, 0.1159
    %v121 = vadd.f32 %v73, 0.1159
    %v122 = vadd.f32 %v74, 0.1159
    %v123 = vadd.f32 %v75, 0.1159
    %v124 = vadd.f32 %v76, 0.1159
    %v125 = vadd.f32 %v77, 0.1159
    %v126 = vadd.f32 %v78, 0.1159
    %v127 = vadd.f32 %v79, 0.1159
    %v128 = vadd.f32 %v80, 0.1159
    %v129 = vadd.f32 %v81, 0.1159
    %v130 = vadd.f32 %v82, 0.1159
    %v131 = vadd.f32 %v83, 0.1159
    %v132 = vadd.f32 %v84, 0.1159
    %v133 = vadd.f32 %v85, 0.1159
    %v134 = vadd.f32 %v86, 0.1159
    %v135 = vadd.f32 %v87, 0.1159
    %v136 = vadd.f32 %v88, 0.1159
    %v137 = vadd.f32 %v89, 0.1159
    %v138 = vadd.f32 %v90, 0.1159
    %v139 = vadd.f32 %v91, 0.1159
    %v140 = vadd.f32 %v92, 0.1159
    %v141 = vadd.f32 %v93, 0.1159
    %v142 = vadd.f32 %v94, 0.1159
    %v143 = vadd.f32 %v95, 0.1159
    %v144 = vadd.f32 %v96, 0.1159
    %v145 = vadd.f32 %v97, 0.1159
    %v146 = vadd.f32 %v98, 0.1159
    %v147 = vadd.f32 %v99, 0.1159
    %v148 = vadd.f32 %v100, 0.1159
    %v149 = vadd.f32 %v101, 0.1159
    %v150 = vadd.f32 %v102, 0.1159
    %v151 = vadd.f32 %v103, 0.1159
    %v152 = vadd.f32 %v104, 0.1159
    %v153 = vadd.f32 %v105, 0.1159
    %v154 = vadd.f32 %v106, 0.1159
    %v155 = vadd.f32 %v107, 0.1159
    %v156 = vadd.f32 %v108, 0.1159
    %v157 = vadd.f32 %v109, 0.1159
    %v158 = vadd.f32 %v110, 0.1159
    %v159 = vadd.f32 %v111, 0.1159
    %v160 = vadd.f32 %v112, 0.1159
    %v161 = vadd.f32 %v113, 0.1159
    %v162 = vadd.f32 %v114, 0.1159
    %v163 = vadd.f32 %v115, 0.1159
    %v164 = vadd.f32 %v116, 0.1159
    %v165 = vadd.f32 %v117, 0.1159
    %v166 = vadd.f32 %v118, 0.1159
    %167 = vst [vmem:[#allocation5] sm:$0xff] %v119
    %168 = vst [vmem:[#allocation5 + $0x8] sm:$0xff] %v120
    %169 = vst [vmem:[#allocation5 + $0x10] sm:$0xff] %v121
    %170 = vst [vmem:[#allocation5 + $0x18] sm:$0xff] %v122
    %171 = vst [vmem:[#allocation5 + $0x20] sm:$0xff] %v123
    %172 = vst [vmem:[#allocation5 + $0x28] sm:$0xff] %v124
    %173 = vst [vmem:[#allocation5 + $0x30] sm:$0xff] %v125
    %174 = vst [vmem:[#allocation5 + $0x38] sm:$0xff] %v126
    %175 = vst [vmem:[#allocation5 + $0x40] sm:$0xff] %v127
    %176 = vst [vmem:[#allocation5 + $0x48] sm:$0xff] %v128
    %177 = vst [vmem:[#allocation5 + $0x50] sm:$0xff] %v129
    %178 = vst [vmem:[#allocation5 + $0x58] sm:$0xff] %v130
    %179 = vst [vmem:[#allocation5 + $0x60] sm:$0xff] %v131
    %180 = vst [vmem:[#allocation5 + $0x68] sm:$0xff] %v132
    %181 = vst [vmem:[#allocation5 + $0x70] sm:$0xff] %v133
    %182 = vst [vmem:[#allocation5 + $0x78] sm:$0xff] %v134
    %183 = vst [vmem:[#allocation5 + $0x80] sm:$0xff] %v135
    %184 = vst [vmem:[#allocation5 + $0x88] sm:$0xff] %v136
    %185 = vst [vmem:[#allocation5 + $0x90] sm:$0xff] %v137
    %186 = vst [vmem:[#allocation5 + $0x98] sm:$0xff] %v138
    %187 = vst [vmem:[#allocation5 + $0xa0] sm:$0xff] %v139
    %188 = vst [vmem:[#allocation5 + $0xa8] sm:$0xff] %v140
    %189 = vst [vmem:[#allocation5 + $0xb0] sm:$0xff] %v141
    %190 = vst [vmem:[#allocation5 + $0xb8] sm:$0xff] %v142
    %191 = vst [vmem:[#allocation5 + $0xc0] sm:$0xff] %v143
    %192 = vst [vmem:[#allocation5 + $0xc8] sm:$0xff] %v144
    %193 = vst [vmem:[#allocation5 + $0xd0] sm:$0xff] %v145
    %194 = vst [vmem:[#allocation5 + $0xd8] sm:$0xff] %v146
    %195 = vst [vmem:[#allocation5 + $0xe0] sm:$0xff] %v147
    %196 = vst [vmem:[#allocation5 + $0xe8] sm:$0xff] %v148
    %197 = vst [vmem:[#allocation5 + $0xf0] sm:$0xff] %v149
    %198 = vst [vmem:[#allocation5 + $0xf8] sm:$0xff] %v150
    %199 = vst [vmem:[#allocation5 + $0x100] sm:$0xff] %v151
    %200 = vst [vmem:[#allocation5 + $0x108] sm:$0xff] %v152
    %201 = vst [vmem:[#allocation5 + $0x110] sm:$0xff] %v153
    %202 = vst [vmem:[#allocation5 + $0x118] sm:$0xff] %v154
    %203 = vst [vmem:[#allocation5 + $0x120] sm:$0xff] %v155
    %204 = vst [vmem:[#allocation5 + $0x128] sm:$0xff] %v156
    %205 = vst [vmem:[#allocation5 + $0x130] sm:$0xff] %v157
    %206 = vst [vmem:[#allocation5 + $0x138] sm:$0xff] %v158
    %207 = vst [vmem:[#allocation5 + $0x140] sm:$0xff] %v159
    %208 = vst [vmem:[#allocation5 + $0x148] sm:$0xff] %v160
    %209 = vst [vmem:[#allocation5 + $0x150] sm:$0xff] %v161
    %210 = vst [vmem:[#allocation5 + $0x158] sm:$0xff] %v162
    %211 = vst [vmem:[#allocation5 + $0x160] sm:$0xff] %v163
    %212 = vst [vmem:[#allocation5 + $0x168] sm:$0xff] %v164
    %213 = vst [vmem:[#allocation5 + $0x170] sm:$0xff] %v165
    %214 = vst [vmem:[#allocation5 + $0x178] sm:$0xff] %v166
    // Predicated region
    $region10: #{tpu_custom_call.1} parent=1 // pred_check
      _
    $region11: #{tpu_custom_call.1} parent=1 // pred_check_branch
      %216 = sbr.rel (0) target = $region13
    $region12: #{tpu_custom_call.1} parent=1 // pred_region
      %s218 = ssub.s32 6144, 6144
      %219 = vsyncadd [#allocation4], %s218
      %s220 = sshll.u32 [#allocation5], 4
      %s221 = int_to_ptr.vmem [resolvable:$true] %s220
      %226 = dma.vmem_to_hbm [thread:$0]  %s221, 6144, %s1, [#allocation4], 384, 384, 24
    $region13: #{tpu_custom_call.1} parent=1 // pred_fallthru
      _
    // Predicated region
    $region14: #{tpu_custom_call.1} parent=1 // pred_check
      _
    $region15: #{tpu_custom_call.1} parent=1 // pred_check_branch
      %228 = sbr.rel (0) target = $region17
    $region16: #{tpu_custom_call.1} parent=1 // pred_region
      %229 = dma.done [#allocation4], 6144
    $region17: #{tpu_custom_call.1} parent=1 // pred_fallthru
      _
    %230 = vsyncpa [#allocation3], 1
    %231 = vsyncpa [#allocation4], 1

</llo_original>
